<compile_context>
chip_gen: v6e
topology: v6e:2x2x1
jax: 0.10.0
libtpu: 0.0.40
codegen_flags: <defaults>
</compile_context>

<pallas_src>
import jax
import jax.numpy as jnp
from jax.experimental import pallas as pl
from jax.experimental.pallas import tpu as pltpu

HIDDEN = 100
LANE = 128  # TPU lane width (internal hidden dims padded to this).

_SQRT_2_OVER_PI = 0.7978845608028654


def _cdiv(a, b):
    return -(-a // b)


def _round_up(n, m):
    return ((n + m - 1) // m) * m


def _gelu_tanh(x):
    # tanh-approx GELU (PyTorch F.gelu(approximate='tanh')); EUP path.
    return 0.5 * x * (1.0 + jnp.tanh(_SQRT_2_OVER_PI * (x + 0.044715 * x * x * x)))


def qnetwork_kernel(x_ref,
                    w1_ref, b1_ref,
                    w2_ref, b2_ref,
                    w3_ref, b3_ref,
                    w4_ref, b4_ref,
                    o_ref):
    # x already bf16; MXU matmuls accumulate in f32; bias/GELU stay in f32.
    x = x_ref[...]

    h = jnp.dot(x, w1_ref[...], preferred_element_type=jnp.float32) + b1_ref[...]
    h = _gelu_tanh(h)

    h = jnp.dot(h.astype(jnp.bfloat16), w2_ref[...],
                preferred_element_type=jnp.float32) + b2_ref[...]
    h = _gelu_tanh(h)

    h = jnp.dot(h.astype(jnp.bfloat16), w3_ref[...],
                preferred_element_type=jnp.float32) + b3_ref[...]
    h = _gelu_tanh(h)

    out = jnp.dot(h.astype(jnp.bfloat16), w4_ref[...],
                  preferred_element_type=jnp.float32) + b4_ref[...]
    o_ref[...] = out.astype(o_ref.dtype)


def init_qnetwork_params(key, input_dim, output_dim):
    """Deterministic init mimicking nn.Linear (uniform(-1/sqrt(fan_in), +)).

    Weights are stored as (in_features, out_features) == PyTorch weight.T.
    """
    dims = [(input_dim, HIDDEN), (HIDDEN, HIDDEN),
            (HIDDEN, HIDDEN), (HIDDEN, output_dim)]
    params = {}
    for i, (fan_in, fan_out) in enumerate(dims, start=1):
        key, kw, kb = jax.random.split(key, 3)
        bound = 1.0 / jnp.sqrt(jnp.float32(fan_in))
        params[f"w{i}"] = jax.random.uniform(
            kw, (fan_in, fan_out), jnp.float32, -bound, bound)
        params[f"b{i}"] = jax.random.uniform(
            kb, (1, fan_out), jnp.float32, -bound, bound)
    return params


def pad_params_for_tpu(params, input_dim, output_dim):
    """Pad only where needed: hidden dims -> 128 lanes, output -> 8 lanes.

    The input dim (w1 rows) is left unpadded so x never has to be padded.
    Weights go to bf16 (MXU operands); biases stay f32 (elementwise path).
    """
    out_pad = _round_up(output_dim, 8)
    dims = [(input_dim, HIDDEN), (HIDDEN, HIDDEN),
            (HIDDEN, HIDDEN), (HIDDEN, output_dim)]
    pads = [(input_dim, LANE), (LANE, LANE), (LANE, LANE), (LANE, out_pad)]
    padded = {}
    for i, ((fi, fo), (fi_p, fo_p)) in enumerate(zip(dims, pads), start=1):
        w = jnp.zeros((fi_p, fo_p), jnp.float32).at[:fi, :fo].set(params[f"w{i}"])
        b = jnp.zeros((1, fo_p), jnp.float32).at[:, :fo].set(params[f"b{i}"])
        padded[f"w{i}"] = w.astype(jnp.bfloat16)
        padded[f"b{i}"] = b
    return padded


def qnetwork_forward(x, padded, output_dim, *, block_b=1024):
    """x: (B, input_dim) f32 (unpadded). padded: dict from pad_params_for_tpu."""
    B, in_dim = x.shape
    out_pad = padded["w4"].shape[1]

    # Batch tile: multiple of 16 (bf16 sublane packing).  Force >= 2 grid
    # steps when the batch allows it (v7x: 2 TensorCores share a parallel
    # axis), but cap the tile at block_b so large batches still pipeline
    # x/out DMA against compute without ballooning b_pad.
    n_steps = max(2, _cdiv(B, block_b))
    tb = _round_up(_cdiv(B, n_steps), 16)
    b_pad = _round_up(B, tb)
    grid = (b_pad // tb,)

    # bf16 at the boundary: same rounding the kernel applied, half the DMA.
    x_bf = x.astype(jnp.bfloat16)
    if b_pad != B:
        x_bf = jnp.pad(x_bf, ((0, b_pad - B), (0, 0)))

    def const_spec(arr):
        return pl.BlockSpec(arr.shape, lambda i: (0, 0))

    in_specs = [
        pl.BlockSpec((tb, in_dim), lambda i: (i, 0)),
        const_spec(padded["w1"]), const_spec(padded["b1"]),
        const_spec(padded["w2"]), const_spec(padded["b2"]),
        const_spec(padded["w3"]), const_spec(padded["b3"]),
        const_spec(padded["w4"]), const_spec(padded["b4"]),
    ]

    out_padded = pl.pallas_call(
        qnetwork_kernel,
        out_shape=jax.ShapeDtypeStruct((b_pad, out_pad), jnp.float32),
        grid=grid,
        in_specs=in_specs,
        out_specs=pl.BlockSpec((tb, out_pad), lambda i: (i, 0)),
        compiler_params=pltpu.CompilerParams(
            dimension_semantics=("parallel",)),
    )(x_bf,
      padded["w1"], padded["b1"],
      padded["w2"], padded["b2"],
      padded["w3"], padded["b3"],
      padded["w4"], padded["b4"])

    # Slice away batch padding and the (tiny) padded output lanes.
    return out_padded[:B, :output_dim]


def qnetwork_reference(x, params):
    """Pure-JAX f32 reference (exact erf GELU, like PyTorch default)."""
    h = x
    for i in range(1, 4):
        h = h @ params[f"w{i}"] + params[f"b{i}"]
        h = jax.nn.gelu(h, approximate=False)
    return h @ params["w4"] + params["b4"]


if __name__ == "__main__":
    key = jax.random.PRNGKey(0)
    k_in, k_params = jax.random.split(key)

    batch = 8
    input_dim = 16
    output_dim = 4

    x = jax.random.normal(k_in, (batch, input_dim), dtype=jnp.float32)
    params = init_qnetwork_params(k_params, input_dim, output_dim)
    padded = pad_params_for_tpu(params, input_dim, output_dim)

    out = qnetwork_forward(x, padded, output_dim)
    out = jax.block_until_ready(out)

    ref = qnetwork_reference(x, params)
    assert out.shape == (batch, output_dim)
    # bf16 MXU operands + tanh-approx GELU vs. pure-f32 exact reference:
    # expected deviation is ~1e-2; check within a bf16-appropriate tolerance.
    assert jnp.allclose(out, ref, atol=5e-2, rtol=5e-2), (
        f"max abs err = {float(jnp.max(jnp.abs(out - ref)))}")

    print("KERNEL_OK")
</pallas_src>

<mosaic_0001>
module attributes {stable_mosaic.version = 11 : i64} {
  func.func @qnetwork_kernel(%arg0: i32, %arg1: memref<16x16xbf16, #tpu.memory_space<vmem>>, %arg2: memref<16x128xbf16, #tpu.memory_space<vmem>>, %arg3: memref<1x128xf32, #tpu.memory_space<vmem>>, %arg4: memref<128x128xbf16, #tpu.memory_space<vmem>>, %arg5: memref<1x128xf32, #tpu.memory_space<vmem>>, %arg6: memref<128x128xbf16, #tpu.memory_space<vmem>>, %arg7: memref<1x128xf32, #tpu.memory_space<vmem>>, %arg8: memref<128x8xbf16, #tpu.memory_space<vmem>>, %arg9: memref<1x8xf32, #tpu.memory_space<vmem>>, %arg10: memref<16x8xf32, #tpu.memory_space<vmem>>) attributes {dimension_semantics = [#tpu.dimension_semantics<parallel>], iteration_bounds = array<i64: 1>, scalar_prefetch = 0 : i64, scratch_operands = 0 : i64, tpu.core_type = #tpu.core_type<tc>, window_params = [{transform_indices = @transform_0, window_bounds = array<i64: 16, 16>}, {pipeline_mode = #tpu.pipeline_mode<synchronous>, transform_indices = @transform_1, window_bounds = array<i64: 16, 128>}, {pipeline_mode = #tpu.pipeline_mode<synchronous>, transform_indices = @transform_2, window_bounds = array<i64: 1, 128>}, {pipeline_mode = #tpu.pipeline_mode<synchronous>, transform_indices = @transform_3, window_bounds = array<i64: 128, 128>}, {pipeline_mode = #tpu.pipeline_mode<synchronous>, transform_indices = @transform_4, window_bounds = array<i64: 1, 128>}, {pipeline_mode = #tpu.pipeline_mode<synchronous>, transform_indices = @transform_5, window_bounds = array<i64: 128, 128>}, {pipeline_mode = #tpu.pipeline_mode<synchronous>, transform_indices = @transform_6, window_bounds = array<i64: 1, 128>}, {pipeline_mode = #tpu.pipeline_mode<synchronous>, transform_indices = @transform_7, window_bounds = array<i64: 128, 8>}, {pipeline_mode = #tpu.pipeline_mode<synchronous>, transform_indices = @transform_8, window_bounds = array<i64: 1, 8>}, {transform_indices = @transform_9, window_bounds = array<i64: 16, 8>}]} {
    %c0 = arith.constant 0 : index
    %c0_0 = arith.constant 0 : index
    %0 = vector.load %arg1[%c0, %c0_0] : memref<16x16xbf16, #tpu.memory_space<vmem>>, vector<16x16xbf16>
    %c0_1 = arith.constant 0 : index
    %c0_2 = arith.constant 0 : index
    %1 = vector.load %arg2[%c0_1, %c0_2] : memref<16x128xbf16, #tpu.memory_space<vmem>>, vector<16x128xbf16>
    %cst = arith.constant dense<0.000000e+00> : vector<16x128xf32>
    %2 = tpu.matmul %0, %1, %cst {dimension_numbers = #tpu.dot_dimension_numbers<[1], [0], [0], [1], [0, 0, 1, 1], [], []>} : vector<16x16xbf16>, vector<16x128xbf16>, vector<16x128xf32> -> vector<16x128xf32>
    %c0_3 = arith.constant 0 : index
    %c0_4 = arith.constant 0 : index
    %3 = vector.load %arg3[%c0_3, %c0_4] : memref<1x128xf32, #tpu.memory_space<vmem>>, vector<1x128xf32>
    %4 = vector.broadcast %3 : vector<1x128xf32> to vector<16x128xf32>
    %5 = arith.addf %2, %4 : vector<16x128xf32>
    %cst_5 = arith.constant 5.000000e-01 : f32
    %6 = vector.broadcast %cst_5 : f32 to vector<16x128xf32>
    %7 = arith.mulf %6, %5 : vector<16x128xf32>
    %cst_6 = arith.constant 4.471500e-02 : f32
    %8 = vector.broadcast %cst_6 : f32 to vector<16x128xf32>
    %9 = arith.mulf %8, %5 : vector<16x128xf32>
    %10 = arith.mulf %9, %5 : vector<16x128xf32>
    %11 = arith.mulf %10, %5 : vector<16x128xf32>
    %12 = arith.addf %5, %11 : vector<16x128xf32>
    %cst_7 = arith.constant 0.797884583 : f32
    %13 = vector.broadcast %cst_7 : f32 to vector<16x128xf32>
    %14 = arith.mulf %13, %12 : vector<16x128xf32>
    %15 = math.tanh %14 : vector<16x128xf32>
    %cst_8 = arith.constant 1.000000e+00 : f32
    %16 = vector.broadcast %cst_8 : f32 to vector<16x128xf32>
    %17 = arith.addf %16, %15 : vector<16x128xf32>
    %18 = arith.mulf %7, %17 : vector<16x128xf32>
    %19 = arith.truncf %18 : vector<16x128xf32> to vector<16x128xbf16>
    %c0_9 = arith.constant 0 : index
    %c0_10 = arith.constant 0 : index
    %20 = vector.load %arg4[%c0_9, %c0_10] : memref<128x128xbf16, #tpu.memory_space<vmem>>, vector<128x128xbf16>
    %cst_11 = arith.constant dense<0.000000e+00> : vector<16x128xf32>
    %21 = tpu.matmul %19, %20, %cst_11 {dimension_numbers = #tpu.dot_dimension_numbers<[1], [0], [0], [1], [0, 0, 1, 1], [], []>} : vector<16x128xbf16>, vector<128x128xbf16>, vector<16x128xf32> -> vector<16x128xf32>
    %c0_12 = arith.constant 0 : index
    %c0_13 = arith.constant 0 : index
    %22 = vector.load %arg5[%c0_12, %c0_13] : memref<1x128xf32, #tpu.memory_space<vmem>>, vector<1x128xf32>
    %23 = vector.broadcast %22 : vector<1x128xf32> to vector<16x128xf32>
    %24 = arith.addf %21, %23 : vector<16x128xf32>
    %cst_14 = arith.constant 5.000000e-01 : f32
    %25 = vector.broadcast %cst_14 : f32 to vector<16x128xf32>
    %26 = arith.mulf %25, %24 : vector<16x128xf32>
    %cst_15 = arith.constant 4.471500e-02 : f32
    %27 = vector.broadcast %cst_15 : f32 to vector<16x128xf32>
    %28 = arith.mulf %27, %24 : vector<16x128xf32>
    %29 = arith.mulf %28, %24 : vector<16x128xf32>
    %30 = arith.mulf %29, %24 : vector<16x128xf32>
    %31 = arith.addf %24, %30 : vector<16x128xf32>
    %cst_16 = arith.constant 0.797884583 : f32
    %32 = vector.broadcast %cst_16 : f32 to vector<16x128xf32>
    %33 = arith.mulf %32, %31 : vector<16x128xf32>
    %34 = math.tanh %33 : vector<16x128xf32>
    %cst_17 = arith.constant 1.000000e+00 : f32
    %35 = vector.broadcast %cst_17 : f32 to vector<16x128xf32>
    %36 = arith.addf %35, %34 : vector<16x128xf32>
    %37 = arith.mulf %26, %36 : vector<16x128xf32>
    %38 = arith.truncf %37 : vector<16x128xf32> to vector<16x128xbf16>
    %c0_18 = arith.constant 0 : index
    %c0_19 = arith.constant 0 : index
    %39 = vector.load %arg6[%c0_18, %c0_19] : memref<128x128xbf16, #tpu.memory_space<vmem>>, vector<128x128xbf16>
    %cst_20 = arith.constant dense<0.000000e+00> : vector<16x128xf32>
    %40 = tpu.matmul %38, %39, %cst_20 {dimension_numbers = #tpu.dot_dimension_numbers<[1], [0], [0], [1], [0, 0, 1, 1], [], []>} : vector<16x128xbf16>, vector<128x128xbf16>, vector<16x128xf32> -> vector<16x128xf32>
    %c0_21 = arith.constant 0 : index
    %c0_22 = arith.constant 0 : index
    %41 = vector.load %arg7[%c0_21, %c0_22] : memref<1x128xf32, #tpu.memory_space<vmem>>, vector<1x128xf32>
    %42 = vector.broadcast %41 : vector<1x128xf32> to vector<16x128xf32>
    %43 = arith.addf %40, %42 : vector<16x128xf32>
    %cst_23 = arith.constant 5.000000e-01 : f32
    %44 = vector.broadcast %cst_23 : f32 to vector<16x128xf32>
    %45 = arith.mulf %44, %43 : vector<16x128xf32>
    %cst_24 = arith.constant 4.471500e-02 : f32
    %46 = vector.broadcast %cst_24 : f32 to vector<16x128xf32>
    %47 = arith.mulf %46, %43 : vector<16x128xf32>
    %48 = arith.mulf %47, %43 : vector<16x128xf32>
    %49 = arith.mulf %48, %43 : vector<16x128xf32>
    %50 = arith.addf %43, %49 : vector<16x128xf32>
    %cst_25 = arith.constant 0.797884583 : f32
    %51 = vector.broadcast %cst_25 : f32 to vector<16x128xf32>
    %52 = arith.mulf %51, %50 : vector<16x128xf32>
    %53 = math.tanh %52 : vector<16x128xf32>
    %cst_26 = arith.constant 1.000000e+00 : f32
    %54 = vector.broadcast %cst_26 : f32 to vector<16x128xf32>
    %55 = arith.addf %54, %53 : vector<16x128xf32>
    %56 = arith.mulf %45, %55 : vector<16x128xf32>
    %57 = arith.truncf %56 : vector<16x128xf32> to vector<16x128xbf16>
    %c0_27 = arith.constant 0 : index
    %c0_28 = arith.constant 0 : index
    %58 = vector.load %arg8[%c0_27, %c0_28] : memref<128x8xbf16, #tpu.memory_space<vmem>>, vector<128x8xbf16>
    %cst_29 = arith.constant dense<0.000000e+00> : vector<16x8xf32>
    %59 = tpu.matmul %57, %58, %cst_29 {dimension_numbers = #tpu.dot_dimension_numbers<[1], [0], [0], [1], [0, 0, 1, 1], [], []>} : vector<16x128xbf16>, vector<128x8xbf16>, vector<16x8xf32> -> vector<16x8xf32>
    %c0_30 = arith.constant 0 : index
    %c0_31 = arith.constant 0 : index
    %60 = vector.load %arg9[%c0_30, %c0_31] : memref<1x8xf32, #tpu.memory_space<vmem>>, vector<1x8xf32>
    %61 = vector.broadcast %60 : vector<1x8xf32> to vector<16x8xf32>
    %62 = arith.addf %59, %61 : vector<16x8xf32>
    %c0_32 = arith.constant 0 : index
    %c0_33 = arith.constant 0 : index
    %63 = vector.load %arg10[%c0_32, %c0_33] : memref<16x8xf32, #tpu.memory_space<vmem>>, vector<16x8xf32>
    tpu.vector_store %arg10[%c0_32, %c0_33], %62 {strides = array<i32>} : memref<16x8xf32, #tpu.memory_space<vmem>>, vector<16x8xf32>,
    return
  }
  func.func @transform_0(%arg0: i32) -> (i32, i32) {
    %c0_i32 = arith.constant 0 : i32
    %c0_i32_0 = arith.constant 0 : i32
    return %arg0, %c0_i32 : i32, i32
  }
  func.func @transform_1(%arg0: i32) -> (i32, i32) {
    %c0_i32 = arith.constant 0 : i32
    %c0_i32_0 = arith.constant 0 : i32
    %c0_i32_1 = arith.constant 0 : i32
    return %c0_i32, %c0_i32_0 : i32, i32
  }
  func.func @transform_2(%arg0: i32) -> (i32, i32) {
    %c0_i32 = arith.constant 0 : i32
    %c0_i32_0 = arith.constant 0 : i32
    %c0_i32_1 = arith.constant 0 : i32
    return %c0_i32, %c0_i32_0 : i32, i32
  }
  func.func @transform_3(%arg0: i32) -> (i32, i32) {
    %c0_i32 = arith.constant 0 : i32
    %c0_i32_0 = arith.constant 0 : i32
    %c0_i32_1 = arith.constant 0 : i32
    return %c0_i32, %c0_i32_0 : i32, i32
  }
  func.func @transform_4(%arg0: i32) -> (i32, i32) {
    %c0_i32 = arith.constant 0 : i32
    %c0_i32_0 = arith.constant 0 : i32
    %c0_i32_1 = arith.constant 0 : i32
    return %c0_i32, %c0_i32_0 : i32, i32
  }
  func.func @transform_5(%arg0: i32) -> (i32, i32) {
    %c0_i32 = arith.constant 0 : i32
    %c0_i32_0 = arith.constant 0 : i32
    %c0_i32_1 = arith.constant 0 : i32
    return %c0_i32, %c0_i32_0 : i32, i32
  }
  func.func @transform_6(%arg0: i32) -> (i32, i32) {
    %c0_i32 = arith.constant 0 : i32
    %c0_i32_0 = arith.constant 0 : i32
    %c0_i32_1 = arith.constant 0 : i32
    return %c0_i32, %c0_i32_0 : i32, i32
  }
  func.func @transform_7(%arg0: i32) -> (i32, i32) {
    %c0_i32 = arith.constant 0 : i32
    %c0_i32_0 = arith.constant 0 : i32
    %c0_i32_1 = arith.constant 0 : i32
    return %c0_i32, %c0_i32_0 : i32, i32
  }
  func.func @transform_8(%arg0: i32) -> (i32, i32) {
    %c0_i32 = arith.constant 0 : i32
    %c0_i32_0 = arith.constant 0 : i32
    %c0_i32_1 = arith.constant 0 : i32
    return %c0_i32, %c0_i32_0 : i32, i32
  }
  func.func @transform_9(%arg0: i32) -> (i32, i32) {
    %c0_i32 = arith.constant 0 : i32
    %c0_i32_0 = arith.constant 0 : i32
    return %arg0, %c0_i32 : i32, i32
  }
}

</mosaic_0001>

<llo_original>
// kernel: tpu_custom_call.1
$region0: #{tpu_custom_call.1}
  #allocation0 [shape = 'u32[]', space=smem, size = 0x4, offset = 0x4, fixed_abs, tag = 'smem constant byte address 0x4 - core index']
  #allocation1 [shape = 'u32[144,128]{1,0:T(1,128)}', space=vmem, size = 0x12000, scoped, tag = 'internal scratch']
  %s0 = inlined_call_operand.vmem [shape: bf16[16,16], index: 0, kind: input, shape index: {}]
  %s1 = inlined_call_operand.hbm [shape: bf16[16,128], index: 1, kind: input, shape index: {}]
  %s2 = inlined_call_operand.vmem [shape: f32[1,128], index: 2, kind: input, shape index: {}]
  %s3 = inlined_call_operand.vmem [shape: bf16[128,128], index: 3, kind: input, shape index: {}]
  %s4 = inlined_call_operand.hbm [shape: f32[1,128], index: 4, kind: input, shape index: {}]
  %s5 = inlined_call_operand.hbm [shape: bf16[128,128], index: 5, kind: input, shape index: {}]
  %s6 = inlined_call_operand.vmem [shape: f32[1,128], index: 6, kind: input, shape index: {}]
  %s7 = inlined_call_operand.vmem [shape: bf16[128,8], index: 7, kind: input, shape index: {}]
  %s8 = inlined_call_operand.vmem [shape: f32[1,8], index: 8, kind: input, shape index: {}]
  %s9 = inlined_call_operand.vmem [shape: f32[16,8], index: 9, kind: output, shape index: {}]
  %s10 = sld [smem:[#allocation0]]
  $region58: #{tpu_custom_call.1} parent=0
    _
  %s12 = ssub.s32 1, %s10
  %s13 = scalar_select 0, %s12, %s10
  $region1: #{tpu_custom_call.1} parent=0
    #allocation2 [shape = 'u8[4096]{0}', space=vmem, size = 0x1000, scoped, tag = 'input window, operand 1, single buffered']
    #allocation3 [shape = 's32[1]{0}', space=sflag, size = 0x4, scoped, tag = 'scoped memory for tpu_custom_call.1']
    #allocation4 [shape = 'u8[512]{0}', space=vmem, size = 0x400, scoped, tag = 'input window, operand 4, single buffered']
    #allocation5 [shape = 's32[1]{0}', space=sflag, size = 0x4, scoped, tag = 'scoped memory for tpu_custom_call.1']
    #allocation6 [shape = 'u8[32768]{0}', space=vmem, size = 0x8000, scoped, tag = 'input window, operand 5, single buffered']
    %14 = vsyncpa [#allocation3], 0
    %15 = vsyncpa [#allocation5], 0
    // Predicated region
    $region2: #{tpu_custom_call.1} parent=1 // pred_check
      _
    $region3: #{tpu_custom_call.1} parent=1 // pred_check_branch
      %17 = sbr.rel (0) target = $region5
    $region4: #{tpu_custom_call.1} parent=1 // pred_region
      _
    $region5: #{tpu_custom_call.1} parent=1 // pred_fallthru
      _
    // Predicated region
    $region6: #{tpu_custom_call.1} parent=1 // pred_check
      _
    $region7: #{tpu_custom_call.1} parent=1 // pred_check_branch
      %19 = sbr.rel (0) target = $region9
    $region8: #{tpu_custom_call.1} parent=1 // pred_region
      %s21 = ssub.s32 128, 128
      %22 = vsyncadd [#allocation3], %s21
      %s23 = sshll.u32 [#allocation2], 4
      %s24 = int_to_ptr.vmem [resolvable:$true] %s23
      %29 = dma.hbm_to_vmem [thread:$0]  %s1, 128, %s24, [#allocation3], 64, 64, 4
    $region9: #{tpu_custom_call.1} parent=1 // pred_fallthru
      _
    // Predicated region
    $region10: #{tpu_custom_call.1} parent=1 // pred_check
      _
    $region11: #{tpu_custom_call.1} parent=1 // pred_check_branch
      %31 = sbr.rel (0) target = $region13
    $region12: #{tpu_custom_call.1} parent=1 // pred_region
      _
    $region13: #{tpu_custom_call.1} parent=1 // pred_fallthru
      _
    // Predicated region
    $region14: #{tpu_custom_call.1} parent=1 // pred_check
      _
    $region15: #{tpu_custom_call.1} parent=1 // pred_check_branch
      %33 = sbr.rel (0) target = $region17
    $region16: #{tpu_custom_call.1} parent=1 // pred_region
      _
    $region17: #{tpu_custom_call.1} parent=1 // pred_fallthru
      _
    // Predicated region
    $region18: #{tpu_custom_call.1} parent=1 // pred_check
      _
    $region19: #{tpu_custom_call.1} parent=1 // pred_check_branch
      %35 = sbr.rel (0) target = $region21
    $region20: #{tpu_custom_call.1} parent=1 // pred_region
      %s37 = ssub.s32 16, 16
      %38 = vsyncadd [#allocation5], %s37
      %s40 = sshll.u32 [#allocation4], 4
      %s41 = int_to_ptr.vmem [resolvable:$true] %s40
      %43 = dma.hbm_to_vmem [thread:$0]  %s4, 16, %s41, [#allocation5]
    $region21: #{tpu_custom_call.1} parent=1 // pred_fallthru
      _
    // Predicated region
    $region22: #{tpu_custom_call.1} parent=1 // pred_check
      _
    $region23: #{tpu_custom_call.1} parent=1 // pred_check_branch
      %45 = sbr.rel (0) target = $region25
    $region24: #{tpu_custom_call.1} parent=1 // pred_region
      %s47 = ssub.s32 1024, 1024
      %48 = vsyncadd [#allocation5], %s47
      %s49 = sshll.u32 [#allocation6], 4
      %s50 = int_to_ptr.vmem [resolvable:$true] %s49
      %55 = dma.hbm_to_vmem [thread:$0]  %s5, 1024, %s50, [#allocation5], 64, 64, 4
    $region25: #{tpu_custom_call.1} parent=1 // pred_fallthru
      _
    // Predicated region
    $region26: #{tpu_custom_call.1} parent=1 // pred_check
      _
    $region27: #{tpu_custom_call.1} parent=1 // pred_check_branch
      %57 = sbr.rel (0) target = $region29
    $region28: #{tpu_custom_call.1} parent=1 // pred_region
      _
    $region29: #{tpu_custom_call.1} parent=1 // pred_fallthru
      _
    // Predicated region
    $region30: #{tpu_custom_call.1} parent=1 // pred_check
      _
    $region31: #{tpu_custom_call.1} parent=1 // pred_check_branch
      %59 = sbr.rel (0) target = $region33
    $region32: #{tpu_custom_call.1} parent=1 // pred_region
      _
    $region33: #{tpu_custom_call.1} parent=1 // pred_fallthru
      _
    // Predicated region
    $region34: #{tpu_custom_call.1} parent=1 // pred_check
      _
    $region35: #{tpu_custom_call.1} parent=1 // pred_check_branch
      %61 = sbr.rel (0) target = $region37
    $region36: #{tpu_custom_call.1} parent=1 // pred_region
      _
    $region37: #{tpu_custom_call.1} parent=1 // pred_fallthru
      _
    // Predicated region
    $region38: #{tpu_custom_call.1} parent=1 // pred_check
      _
    $region39: #{tpu_custom_call.1} parent=1 // pred_check_branch
      %63 = sbr.rel (0) target = $region41
    $region40: #{tpu_custom_call.1} parent=1 // pred_region
      %64 = dma.done [#allocation3], 128
    $region41: #{tpu_custom_call.1} parent=1 // pred_fallthru
      _
    // Predicated region
    $region42: #{tpu_custom_call.1} parent=1 // pred_check
      _
    $region43: #{tpu_custom_call.1} parent=1 // pred_check_branch
      %66 = sbr.rel (0) target = $region45
    $region44: #{tpu_custom_call.1} parent=1 // pred_region
      %67 = dma.done [#allocation5], 16
    $region45: #{tpu_custom_call.1} parent=1 // pred_fallthru
      _
    // Predicated region
    $region46: #{tpu_custom_call.1} parent=1 // pred_check
      _
    $region47: #{tpu_custom_call.1} parent=1 // pred_check_branch
      %69 = sbr.rel (0) target = $region49
    $region48: #{tpu_custom_call.1} parent=1 // pred_region
      %70 = dma.done [#allocation5], 1024
    $region49: #{tpu_custom_call.1} parent=1 // pred_fallthru
      _
    %v72 = vld [vmem:[%s0] sm:$0xf]
    %v73 = vld [vmem:[%s0 + $0x4] sm:$0xf]
    %v74 = vld [vmem:[#allocation2] sm:$0xf]
    %v75 = vld [vmem:[#allocation2 + $0x4] sm:$0xf]
    %v76 = vld [vmem:[%s2] sm:$0x1]
    %v78 = vlaneseq
    %v79 = vshrl.u32 %v78, 7
    %v80 = vsub.s32 0, %v79
    %v81 = vrot.slane %v76, %v80
    %v85 = vunpack.c.l.b16 %v72
    %v86 = vunpack.c.l.b16 %v73
    %v87 = vpack.c.b16 %v86, %v85
    %v90 = vunpack.c.l.b16 %v74
    %v91 = vunpack.c.l.b16 %v75
    %v92 = vpack.c.b16 %v91, %v90
    %vm94 = vcmask 130048
    %v96 = vsel %vm94, %v87, 0
    %98 = vmatprep.subr.bf16.mxu0 0
    %99 = vmatpush1.bf16.msra.mxu0 0
    %100 = vmatprep.subr.bf16.mxu0 0
    %101 = vmatpush1.bf16.msra.mxu0 0
    %102 = vmatprep.subr.bf16.mxu0 0
    %103 = vmatpush1.bf16.msra.mxu0 0
    %104 = vmatprep.subr.bf16.mxu0 0
    %105 = vmatpush1.bf16.msra.mxu0 0
    %106 = vmatprep.subr.bf16.mxu0 0
    %107 = vmatpush1.bf16.msra.mxu0 0
    %108 = vmatprep.subr.bf16.mxu0 0
    %109 = vmatpush1.bf16.msra.mxu0 0
    %110 = vmatprep.subr.bf16.mxu0 0
    %111 = vmatpush1.bf16.msra.mxu0 0
    %112 = vmatprep.subr.bf16.mxu0 0
    %113 = vmatpush1.bf16.msra.mxu0 %v92
    %114 = vmatprep.subr.bf16.mxu0 0
    %115 = vmatpush2.bf16.msra.mxu0 0
    %116 = vmatprep.subr.bf16.mxu0 0
    %117 = vmatpush2.bf16.msra.mxu0 0
    %118 = vmatprep.subr.bf16.mxu0 0
    %119 = vmatpush2.bf16.msra.mxu0 0
    %120 = vmatprep.subr.bf16.mxu0 0
    %121 = vmatpush2.bf16.msra.mxu0 0
    %122 = vmatprep.subr.bf16.mxu0 0
    %123 = vmatpush2.bf16.msra.mxu0 0
    %124 = vmatprep.subr.bf16.mxu0 0
    %125 = vmatpush2.bf16.msra.mxu0 0
    %126 = vmatprep.subr.bf16.mxu0 0
    %127 = vmatpush2.bf16.msra.mxu0 0
    %128 = vmatprep.subr.bf16.mxu0 0
    %129 = vmatpush2.bf16.msra.mxu0 0
    %130 = vmatprep.mubr.bf16.mxu0 0
    %131 = vmatmul.mubr.bf16.gmra.mxu0 %v96
    %v132 = vpop.f32.mrf.mxu0
    %v133 = vadd.f32 %v81, %v132
    %v134 = vpop.f32.mrf.mxu0
    %v135 = vpop.f32.mrf.mxu0
    %v136 = vadd.f32 %v81, %v135
    %v137 = vpop.f32.mrf.mxu0
    %138 = vdwg.mxu0
    %v139 = vmul.f32 %v133, 0.5
    %v140 = vmul.f32 %v136, 0.5
    %v141 = vmul.f32 %v133, 0.044715
    %v142 = vmul.f32 %v136, 0.044715
    %v143 = vmul.f32 %v141, %v133
    %v144 = vmul.f32 %v142, %v136
    %v145 = vmul.f32 %v143, %v133
    %v146 = vmul.f32 %v144, %v136
    %v147 = vadd.f32 %v133, %v145
    %v148 = vadd.f32 %v136, %v146
    %v149 = vmul.f32 %v147, 0.7978846
    %v150 = vmul.f32 %v148, 0.7978846
    %v151 = vtanh.pop %v149
    %v152 = vtanh.pop %v150
    %v153 = vadd.f32 %v151, 1.0
    %v154 = vadd.f32 %v152, 1.0
    %v155 = vmul.f32 %v139, %v153
    %v156 = vmul.f32 %v140, %v154
    %v157 = vpack.c.bf16 %v156, %v155
    %v158 = vld [vmem:[%s3] sm:$0xf]
    %v159 = vld [vmem:[%s3 + $0x4] sm:$0xf]
    %v160 = vld [vmem:[%s3 + $0x8] sm:$0xf]
    %v161 = vld [vmem:[%s3 + $0xc] sm:$0xf]
    %v162 = vld [vmem:[%s3 + $0x10] sm:$0xf]
    %v163 = vld [vmem:[%s3 + $0x14] sm:$0xf]
    %v164 = vld [vmem:[%s3 + $0x18] sm:$0xf]
    %v165 = vld [vmem:[%s3 + $0x1c] sm:$0xf]
    %v166 = vld [vmem:[%s3 + $0x20] sm:$0xf]
    %v167 = vld [vmem:[%s3 + $0x24] sm:$0xf]
    %v168 = vld [vmem:[%s3 + $0x28] sm:$0xf]
    %v169 = vld [vmem:[%s3 + $0x2c] sm:$0xf]
    %v170 = vld [vmem:[%s3 + $0x30] sm:$0xf]
    %v171 = vld [vmem:[%s3 + $0x34] sm:$0xf]
    %v172 = vld [vmem:[%s3 + $0x38] sm:$0xf]
    %v173 = vld [vmem:[%s3 + $0x3c] sm:$0xf]
    %v174 = vld [vmem:[#allocation4] sm:$0x1]
    %v176 = vlaneseq
    %v177 = vshrl.u32 %v176, 7
    %v178 = vsub.s32 0, %v177
    %v179 = vrot.slane %v174, %v178
    %v197 = vunpack.c.l.b16 %v158
    %v198 = vunpack.c.l.b16 %v159
    %v199 = vunpack.c.l.b16 %v160
    %v200 = vunpack.c.l.b16 %v161
    %v201 = vunpack.c.l.b16 %v162
    %v202 = vunpack.c.l.b16 %v163
    %v203 = vunpack.c.l.b16 %v164
    %v204 = vunpack.c.l.b16 %v165
    %v205 = vunpack.c.l.b16 %v166
    %v206 = vunpack.c.l.b16 %v167
    %v207 = vunpack.c.l.b16 %v168
    %v208 = vunpack.c.l.b16 %v169
    %v209 = vunpack.c.l.b16 %v170
    %v210 = vunpack.c.l.b16 %v171
    %v211 = vunpack.c.l.b16 %v172
    %v212 = vunpack.c.l.b16 %v173
    %v213 = vpack.c.b16 %v198, %v197
    %v214 = vpack.c.b16 %v200, %v199
    %v215 = vpack.c.b16 %v202, %v201
    %v216 = vpack.c.b16 %v204, %v203
    %v217 = vpack.c.b16 %v206, %v205
    %v218 = vpack.c.b16 %v208, %v207
    %v219 = vpack.c.b16 %v210, %v209
    %v220 = vpack.c.b16 %v212, %v211
    %229 = vmatprep.subr.bf16.mxu0 0
    %230 = vmatpush1.bf16.msra.mxu0 %v220
    %231 = vmatprep.subr.bf16.mxu0 0
    %232 = vmatpush1.bf16.msra.mxu0 %v219
    %233 = vmatprep.subr.bf16.mxu0 0
    %234 = vmatpush1.bf16.msra.mxu0 %v218
    %235 = vmatprep.subr.bf16.mxu0 0
    %236 = vmatpush1.bf16.msra.mxu0 %v217
    %237 = vmatprep.subr.bf16.mxu0 0
    %238 = vmatpush1.bf16.msra.mxu0 %v216
    %239 = vmatprep.subr.bf16.mxu0 0
    %240 = vmatpush1.bf16.msra.mxu0 %v215
    %241 = vmatprep.subr.bf16.mxu0 0
    %242 = vmatpush1.bf16.msra.mxu0 %v214
    %243 = vmatprep.subr.bf16.mxu0 0
    %244 = vmatpush1.bf16.msra.mxu0 %v213
    %245 = vmatprep.subr.bf16.mxu0 0
    %246 = vmatpush2.bf16.msra.mxu0 0
    %247 = vmatprep.subr.bf16.mxu0 0
    %248 = vmatpush2.bf16.msra.mxu0 0
    %249 = vmatprep.subr.bf16.mxu0 0
    %250 = vmatpush2.bf16.msra.mxu0 0
    %251 = vmatprep.subr.bf16.mxu0 0
    %252 = vmatpush2.bf16.msra.mxu0 0
    %253 = vmatprep.subr.bf16.mxu0 0
    %254 = vmatpush2.bf16.msra.mxu0 0
    %255 = vmatprep.subr.bf16.mxu0 0
    %256 = vmatpush2.bf16.msra.mxu0 0
    %257 = vmatprep.subr.bf16.mxu0 0
    %258 = vmatpush2.bf16.msra.mxu0 0
    %259 = vmatprep.subr.bf16.mxu0 0
    %260 = vmatpush2.bf16.msra.mxu0 0
    %261 = vmatprep.mubr.bf16.mxu0 0
    %262 = vmatmul.mubr.bf16.gmra.mxu0 %v157
    %v263 = vpop.f32.mrf.mxu0
    %v264 = vadd.f32 %v179, %v263
    %v265 = vpop.f32.mrf.mxu0
    %v266 = vpop.f32.mrf.mxu0
    %v267 = vadd.f32 %v179, %v266
    %v268 = vpop.f32.mrf.mxu0
    %269 = vdwg.mxu0
    %v270 = vmul.f32 %v264, 0.5
    %v271 = vmul.f32 %v267, 0.5
    %v272 = vmul.f32 %v264, 0.044715
    %v273 = vmul.f32 %v267, 0.044715
    %v274 = vmul.f32 %v272, %v264
    %v275 = vmul.f32 %v273, %v267
    %v276 = vmul.f32 %v274, %v264
    %v277 = vmul.f32 %v275, %v267
    %v278 = vadd.f32 %v264, %v276
    %v279 = vadd.f32 %v267, %v277
    %v280 = vmul.f32 %v278, 0.7978846
    %v281 = vmul.f32 %v279, 0.7978846
    %v282 = vtanh.pop %v280
    %v283 = vtanh.pop %v281
    %v284 = vadd.f32 %v282, 1.0
    %v285 = vadd.f32 %v283, 1.0
    %v286 = vmul.f32 %v270, %v284
    %v287 = vmul.f32 %v271, %v285
    %v288 = vpack.c.bf16 %v287, %v286
    %v289 = vld [vmem:[#allocation6] sm:$0xf]
    %v290 = vld [vmem:[#allocation6 + $0x4] sm:$0xf]
    %v291 = vld [vmem:[#allocation6 + $0x8] sm:$0xf]
    %v292 = vld [vmem:[#allocation6 + $0xc] sm:$0xf]
    %v293 = vld [vmem:[#allocation6 + $0x10] sm:$0xf]
    %v294 = vld [vmem:[#allocation6 + $0x14] sm:$0xf]
    %v295 = vld [vmem:[#allocation6 + $0x18] sm:$0xf]
    %v296 = vld [vmem:[#allocation6 + $0x1c] sm:$0xf]
    %v297 = vld [vmem:[#allocation6 + $0x20] sm:$0xf]
    %v298 = vld [vmem:[#allocation6 + $0x24] sm:$0xf]
    %v299 = vld [vmem:[#allocation6 + $0x28] sm:$0xf]
    %v300 = vld [vmem:[#allocation6 + $0x2c] sm:$0xf]
    %v301 = vld [vmem:[#allocation6 + $0x30] sm:$0xf]
    %v302 = vld [vmem:[#allocation6 + $0x34] sm:$0xf]
    %v303 = vld [vmem:[#allocation6 + $0x38] sm:$0xf]
    %v304 = vld [vmem:[#allocation6 + $0x3c] sm:$0xf]
    %v305 = vld [vmem:[%s6] sm:$0x1]
    %v307 = vlaneseq
    %v308 = vshrl.u32 %v307, 7
    %v309 = vsub.s32 0, %v308
    %v310 = vrot.slane %v305, %v309
    %v328 = vunpack.c.l.b16 %v289
    %v329 = vunpack.c.l.b16 %v290
    %v330 = vunpack.c.l.b16 %v291
    %v331 = vunpack.c.l.b16 %v292
    %v332 = vunpack.c.l.b16 %v293
    %v333 = vunpack.c.l.b16 %v294
    %v334 = vunpack.c.l.b16 %v295
    %v335 = vunpack.c.l.b16 %v296
    %v336 = vunpack.c.l.b16 %v297
    %v337 = vunpack.c.l.b16 %v298
    %v338 = vunpack.c.l.b16 %v299
    %v339 = vunpack.c.l.b16 %v300
    %v340 = vunpack.c.l.b16 %v301
    %v341 = vunpack.c.l.b16 %v302
    %v342 = vunpack.c.l.b16 %v303
    %v343 = vunpack.c.l.b16 %v304
    %v344 = vpack.c.b16 %v329, %v328
    %v345 = vpack.c.b16 %v331, %v330
    %v346 = vpack.c.b16 %v333, %v332
    %v347 = vpack.c.b16 %v335, %v334
    %v348 = vpack.c.b16 %v337, %v336
    %v349 = vpack.c.b16 %v339, %v338
    %v350 = vpack.c.b16 %v341, %v340
    %v351 = vpack.c.b16 %v343, %v342
    %360 = vmatprep.subr.bf16.mxu0 0
    %361 = vmatpush1.bf16.msra.mxu0 %v351
    %362 = vmatprep.subr.bf16.mxu0 0
    %363 = vmatpush1.bf16.msra.mxu0 %v350
    %364 = vmatprep.subr.bf16.mxu0 0
    %365 = vmatpush1.bf16.msra.mxu0 %v349
    %366 = vmatprep.subr.bf16.mxu0 0
    %367 = vmatpush1.bf16.msra.mxu0 %v348
    %368 = vmatprep.subr.bf16.mxu0 0
    %369 = vmatpush1.bf16.msra.mxu0 %v347
    %370 = vmatprep.subr.bf16.mxu0 0
    %371 = vmatpush1.bf16.msra.mxu0 %v346
    %372 = vmatprep.subr.bf16.mxu0 0
    %373 = vmatpush1.bf16.msra.mxu0 %v345
    %374 = vmatprep.subr.bf16.mxu0 0
    %375 = vmatpush1.bf16.msra.mxu0 %v344
    %376 = vmatprep.subr.bf16.mxu0 0
    %377 = vmatpush2.bf16.msra.mxu0 0
    %378 = vmatprep.subr.bf16.mxu0 0
    %379 = vmatpush2.bf16.msra.mxu0 0
    %380 = vmatprep.subr.bf16.mxu0 0
    %381 = vmatpush2.bf16.msra.mxu0 0
    %382 = vmatprep.subr.bf16.mxu0 0
    %383 = vmatpush2.bf16.msra.mxu0 0
    %384 = vmatprep.subr.bf16.mxu0 0
    %385 = vmatpush2.bf16.msra.mxu0 0
    %386 = vmatprep.subr.bf16.mxu0 0
    %387 = vmatpush2.bf16.msra.mxu0 0
    %388 = vmatprep.subr.bf16.mxu0 0
    %389 = vmatpush2.bf16.msra.mxu0 0
    %390 = vmatprep.subr.bf16.mxu0 0
    %391 = vmatpush2.bf16.msra.mxu0 0
    %392 = vmatprep.mubr.bf16.mxu0 0
    %393 = vmatmul.mubr.bf16.gmra.mxu0 %v288
    %v394 = vpop.f32.mrf.mxu0
    %v395 = vadd.f32 %v310, %v394
    %v396 = vpop.f32.mrf.mxu0
    %v397 = vpop.f32.mrf.mxu0
    %v398 = vadd.f32 %v310, %v397
    %v399 = vpop.f32.mrf.mxu0
    %400 = vdwg.mxu0
    %v401 = vmul.f32 %v395, 0.5
    %v402 = vmul.f32 %v398, 0.5
    %v403 = vmul.f32 %v395, 0.044715
    %v404 = vmul.f32 %v398, 0.044715
    %v405 = vmul.f32 %v403, %v395
    %v406 = vmul.f32 %v404, %v398
    %v407 = vmul.f32 %v405, %v395
    %v408 = vmul.f32 %v406, %v398
    %v409 = vadd.f32 %v395, %v407
    %v410 = vadd.f32 %v398, %v408
    %v411 = vmul.f32 %v409, 0.7978846
    %v412 = vmul.f32 %v410, 0.7978846
    %v413 = vtanh.pop %v411
    %v414 = vtanh.pop %v412
    %v415 = vadd.f32 %v413, 1.0
    %v416 = vadd.f32 %v414, 1.0
    %v417 = vmul.f32 %v401, %v415
    %v418 = vmul.f32 %v402, %v416
    %v419 = vpack.c.bf16 %v418, %v417
    %v420 = vld [vmem:[%s7] sm:$0xf]
    %v421 = vld [vmem:[%s7 + $0x4] sm:$0xf]
    %v422 = vld [vmem:[%s7 + $0x8] sm:$0xf]
    %v423 = vld [vmem:[%s7 + $0xc] sm:$0xf]
    %v424 = vld [vmem:[%s7 + $0x10] sm:$0xf]
    %v425 = vld [vmem:[%s7 + $0x14] sm:$0xf]
    %v426 = vld [vmem:[%s7 + $0x18] sm:$0xf]
    %v427 = vld [vmem:[%s7 + $0x1c] sm:$0xf]
    %v428 = vld [vmem:[%s7 + $0x20] sm:$0xf]
    %v429 = vld [vmem:[%s7 + $0x24] sm:$0xf]
    %v430 = vld [vmem:[%s7 + $0x28] sm:$0xf]
    %v431 = vld [vmem:[%s7 + $0x2c] sm:$0xf]
    %v432 = vld [vmem:[%s7 + $0x30] sm:$0xf]
    %v433 = vld [vmem:[%s7 + $0x34] sm:$0xf]
    %v434 = vld [vmem:[%s7 + $0x38] sm:$0xf]
    %v435 = vld [vmem:[%s7 + $0x3c] sm:$0xf]
    %v436 = vld [vmem:[%s8] sm:$0x1]
    %v438 = vlaneseq
    %v439 = vshrl.u32 %v438, 7
    %v440 = vsub.s32 0, %v439
    %v441 = vrot.slane %v436, %v440
    %v459 = vunpack.c.l.b16 %v420
    %v460 = vunpack.c.l.b16 %v421
    %v461 = vunpack.c.l.b16 %v422
    %v462 = vunpack.c.l.b16 %v423
    %v463 = vunpack.c.l.b16 %v424
    %v464 = vunpack.c.l.b16 %v425
    %v465 = vunpack.c.l.b16 %v426
    %v466 = vunpack.c.l.b16 %v427
    %v467 = vunpack.c.l.b16 %v428
    %v468 = vunpack.c.l.b16 %v429
    %v469 = vunpack.c.l.b16 %v430
    %v470 = vunpack.c.l.b16 %v431
    %v471 = vunpack.c.l.b16 %v432
    %v472 = vunpack.c.l.b16 %v433
    %v473 = vunpack.c.l.b16 %v434
    %v474 = vunpack.c.l.b16 %v435
    %v475 = vpack.c.b16 %v460, %v459
    %v476 = vpack.c.b16 %v462, %v461
    %v477 = vpack.c.b16 %v464, %v463
    %v478 = vpack.c.b16 %v466, %v465
    %v479 = vpack.c.b16 %v468, %v467
    %v480 = vpack.c.b16 %v470, %v469
    %v481 = vpack.c.b16 %v472, %v471
    %v482 = vpack.c.b16 %v474, %v473
    %491 = vmatprep.subr.bf16.mxu0 0
    %492 = vmatpush1.bf16.msra.mxu0 %v482
    %493 = vmatprep.subr.bf16.mxu0 0
    %494 = vmatpush1.bf16.msra.mxu0 %v481
    %495 = vmatprep.subr.bf16.mxu0 0
    %496 = vmatpush1.bf16.msra.mxu0 %v480
    %497 = vmatprep.subr.bf16.mxu0 0
    %498 = vmatpush1.bf16.msra.mxu0 %v479
    %499 = vmatprep.subr.bf16.mxu0 0
    %500 = vmatpush1.bf16.msra.mxu0 %v478
    %501 = vmatprep.subr.bf16.mxu0 0
    %502 = vmatpush1.bf16.msra.mxu0 %v477
    %503 = vmatprep.subr.bf16.mxu0 0
    %504 = vmatpush1.bf16.msra.mxu0 %v476
    %505 = vmatprep.subr.bf16.mxu0 0
    %506 = vmatpush1.bf16.msra.mxu0 %v475
    %507 = vmatprep.subr.bf16.mxu0 0
    %508 = vmatpush2.bf16.msra.mxu0 0
    %509 = vmatprep.subr.bf16.mxu0 0
    %510 = vmatpush2.bf16.msra.mxu0 0
    %511 = vmatprep.subr.bf16.mxu0 0
    %512 = vmatpush2.bf16.msra.mxu0 0
    %513 = vmatprep.subr.bf16.mxu0 0
    %514 = vmatpush2.bf16.msra.mxu0 0
    %515 = vmatprep.subr.bf16.mxu0 0
    %516 = vmatpush2.bf16.msra.mxu0 0
    %517 = vmatprep.subr.bf16.mxu0 0
    %518 = vmatpush2.bf16.msra.mxu0 0
    %519 = vmatprep.subr.bf16.mxu0 0
    %520 = vmatpush2.bf16.msra.mxu0 0
    %521 = vmatprep.subr.bf16.mxu0 0
    %522 = vmatpush2.bf16.msra.mxu0 0
    %523 = vmatprep.mubr.bf16.mxu0 0
    %524 = vmatmul.mubr.bf16.gmra.mxu0 %v419
    %v525 = vpop.f32.mrf.mxu0
    %v526 = vadd.f32 %v441, %v525
    %v527 = vpop.f32.mrf.mxu0
    %v528 = vpop.f32.mrf.mxu0
    %v529 = vadd.f32 %v441, %v528
    %v530 = vpop.f32.mrf.mxu0
    %531 = vdwg.mxu0
    %vm532 = vcmask 64512
    %533 = vst.msk [vmem:[%s9] sm:$0xff] %vm532, %v526
    %534 = vst.msk [vmem:[%s9 + $0x8] sm:$0xff] %vm532, %v529
    // Predicated region
    $region50: #{tpu_custom_call.1} parent=1 // pred_check
      _
    $region51: #{tpu_custom_call.1} parent=1 // pred_check_branch
      %536 = sbr.rel (0) target = $region53
    $region52: #{tpu_custom_call.1} parent=1 // pred_region
      _
    $region53: #{tpu_custom_call.1} parent=1 // pred_fallthru
      _
    // Predicated region
    $region54: #{tpu_custom_call.1} parent=1 // pred_check
      _
    $region55: #{tpu_custom_call.1} parent=1 // pred_check_branch
      %538 = sbr.rel (0) target = $region57
    $region56: #{tpu_custom_call.1} parent=1 // pred_region
      _
    $region57: #{tpu_custom_call.1} parent=1 // pred_fallthru
      _
    %539 = vsyncpa [#allocation3], 1
    %540 = vsyncpa [#allocation5], 1

</llo_original>
